<compile_context>
chip_gen: v7x
topology: tpu7x:2x2x1
jax: 0.10.0
libtpu: 0.0.40
codegen_flags: <defaults>
</compile_context>

<pallas_src>
import math

import jax
import jax.numpy as jnp
from jax.experimental import pallas as pl
from jax.experimental.pallas import tpu as pltpu


def _mlp_kernel(xT_ref, w1_ref, b1_ref, w2_ref, b2_ref, w3c_ref, b3_ref, o_ref):
    # ---- Layer 1: (64,5) @ (5,TB) + b1 -> ReLU, on the VPU (K=5 is a bad MXU
    #      shape in this layout; 5 broadcast multiply-adds keep the MXU free).
    h1 = w1_ref[:, 0:1] * xT_ref[0:1, :]                       # (64, TB) f32
    for k in range(1, 5):                                      # static, unrolled
        h1 = h1 + w1_ref[:, k:k + 1] * xT_ref[k:k + 1, :]
    h1 = jnp.maximum(h1 + b1_ref[...], 0.0)                    # (64, TB) f32

    # ---- Layer 2: (32,64) @ (64,TB) on the MXU, bf16 operands / f32 accumulate.
    h2 = jnp.dot(
        w2_ref[...].astype(jnp.bfloat16),
        h1.astype(jnp.bfloat16),
        preferred_element_type=jnp.float32,
    )                                                          # (32, TB) f32
    h2 = jnp.maximum(h2 + b2_ref[...], 0.0)

    # ---- Layer 3: (1,32) @ (32,TB) as elementwise mul + sublane reduce (XLU).
    h3 = jnp.sum(w3c_ref[...] * h2, axis=0, keepdims=True) + b3_ref[...]  # (1, TB)

    # ---- Sigmoid: EUP exp + EXACT reciprocal (approx=True broke 1e-3 parity).
    o_ref[...] = pl.reciprocal(1.0 + jnp.exp(-h3), approx=False).astype(o_ref.dtype)


def _round_up(v, m):
    return ((v + m - 1) // m) * m


def mlp_forward(x, params, *, tb_max=16384):
    """x: (B, 5) float; params in PyTorch layout: w (out,in), b (out,1)."""
    B, F = x.shape
    assert F == 5

    # Defensive: batch tile must be lane-aligned regardless of user tb_max.
    tb_max = max(128, (int(tb_max) // 128) * 128)

    w1, b1 = params["w1"], params["b1"]        # (64,5), (64,1)
    w2, b2 = params["w2"], params["b2"]        # (32,64), (32,1)
    w3, b3 = params["w3"], params["b3"]        # (1,32), (1,1)
    w3c = w3.reshape(32, 1)                    # column form for the VPU/XLU path

    # Lane-pad the batch, then pick the tile: as large as tb_max allows, but
    # keep >= 2 tiles once the batch spans >= 2 lane groups (v7x megacore).
    b_lane = 128 * pl.cdiv(B, 128)
    if b_lane >= 256:
        TB = min(tb_max, _round_up(pl.cdiv(b_lane, 2), 128))
    else:
        TB = b_lane
    n_tiles = pl.cdiv(b_lane, TB)
    b_total = TB * n_tiles

    # Cast/pad/transpose; with allow_input_fusion this fuses into the pallas
    # operand under jit instead of costing an extra HBM pass.
    x_pad = jnp.pad(x.astype(jnp.float32), ((0, b_total - B), (0, 0)))
    xT = x_pad.T                                               # (5, b_total)

    const2d = lambda arr: pl.BlockSpec(arr.shape, lambda i: (0, 0))

    outT = pl.pallas_call(
        _mlp_kernel,
        out_shape=jax.ShapeDtypeStruct((1, b_total), jnp.float32),
        grid_spec=pl.GridSpec(
            grid=(n_tiles,),
            in_specs=[
                pl.BlockSpec((5, TB), lambda i: (0, i)),       # x tile, batch on lanes
                const2d(w1), const2d(b1),
                const2d(w2), const2d(b2),
                const2d(w3c), const2d(b3),
            ],
            out_specs=pl.BlockSpec((1, TB), lambda i: (0, i)),  # lane-dense output
        ),
        compiler_params=pltpu.CompilerParams(
            dimension_semantics=("parallel",),
            allow_input_fusion=[True] + [False] * 6,
            vmem_limit_bytes=64 * 1024 * 1024,
        ),
    )(xT, w1, b1, w2, b2, w3c, b3)

    return outT[0, :B].reshape(B, 1)


def init_params(key):
    """Deterministic init matching nn.Linear shapes (PyTorch layout: (out, in))."""
    k1, k2, k3, k4, k5, k6 = jax.random.split(key, 6)

    def lin(kw, kb, fan_in, fan_out):
        bound = 1.0 / math.sqrt(fan_in)
        w = jax.random.uniform(kw, (fan_out, fan_in), jnp.float32, -bound, bound)
        b = jax.random.uniform(kb, (fan_out, 1), jnp.float32, -bound, bound)
        return w, b

    w1, b1 = lin(k1, k2, 5, 64)
    w2, b2 = lin(k3, k4, 64, 32)
    w3, b3 = lin(k5, k6, 32, 1)
    return {"w1": w1, "b1": b1, "w2": w2, "b2": b2, "w3": w3, "b3": b3}


def _reference(x, p):
    hp = jax.lax.Precision.HIGHEST
    h = jnp.maximum(jnp.dot(x, p["w1"].T, precision=hp) + p["b1"].T, 0.0)
    h = jnp.maximum(jnp.dot(h, p["w2"].T, precision=hp) + p["b2"].T, 0.0)
    return jax.nn.sigmoid(jnp.dot(h, p["w3"].T, precision=hp) + p["b3"].T)


if __name__ == "__main__":
    key = jax.random.PRNGKey(0)
    kx, kx2, kp = jax.random.split(key, 3)
    params = init_params(kp)

    fwd = jax.jit(mlp_forward)

    # Tolerances: layer-2 MXU operands are bf16 (f32 accumulate); everything
    # else is f32 and the sigmoid reciprocal is exact, so errors stay well
    # below these bounds.
    ATOL, RTOL = 3e-3, 1e-2

    # Small case (single 128-lane tile).
    B = 8
    x = jax.random.normal(kx, (B, 5), jnp.float32)
    out = jax.block_until_ready(fwd(x, params))
    ref = _reference(x, params)
    assert out.shape == (B, 1)
    assert jnp.allclose(out, ref, atol=ATOL, rtol=RTOL), float(jnp.max(jnp.abs(out - ref)))

    # Ragged batch exercising multiple grid tiles (TB=256, grid=2).
    B2 = 300
    x2 = jax.random.normal(kx2, (B2, 5), jnp.float32)
    out2 = jax.block_until_ready(fwd(x2, params))
    ref2 = _reference(x2, params)
    assert out2.shape == (B2, 1)
    assert jnp.allclose(out2, ref2, atol=ATOL, rtol=RTOL), float(jnp.max(jnp.abs(out2 - ref2)))

    print("KERNEL_OK")
</pallas_src>

<mosaic_0001>
module attributes {stable_mosaic.version = 11 : i64} {
  func.func @_mlp_kernel(%arg0: i32, %arg1: memref<5x128xf32, #tpu.memory_space<vmem>>, %arg2: memref<64x5xf32, #tpu.memory_space<vmem>>, %arg3: memref<64x1xf32, #tpu.memory_space<vmem>>, %arg4: memref<32x64xf32, #tpu.memory_space<vmem>>, %arg5: memref<32x1xf32, #tpu.memory_space<vmem>>, %arg6: memref<32x1xf32, #tpu.memory_space<vmem>>, %arg7: memref<1x1xf32, #tpu.memory_space<vmem>>, %arg8: memref<1x128xf32, #tpu.memory_space<vmem>>) attributes {dimension_semantics = [#tpu.dimension_semantics<parallel>], iteration_bounds = array<i64: 1>, scalar_prefetch = 0 : i64, scratch_operands = 0 : i64, tpu.core_type = #tpu.core_type<tc>, window_params = [{transform_indices = @transform_0, window_bounds = array<i64: 5, 128>}, {pipeline_mode = #tpu.pipeline_mode<synchronous>, transform_indices = @transform_1, window_bounds = array<i64: 64, 5>}, {pipeline_mode = #tpu.pipeline_mode<synchronous>, transform_indices = @transform_2, window_bounds = array<i64: 64, 1>}, {pipeline_mode = #tpu.pipeline_mode<synchronous>, transform_indices = @transform_3, window_bounds = array<i64: 32, 64>}, {pipeline_mode = #tpu.pipeline_mode<synchronous>, transform_indices = @transform_4, window_bounds = array<i64: 32, 1>}, {pipeline_mode = #tpu.pipeline_mode<synchronous>, transform_indices = @transform_5, window_bounds = array<i64: 32, 1>}, {pipeline_mode = #tpu.pipeline_mode<synchronous>, transform_indices = @transform_6, window_bounds = array<i64: 1, 1>}, {transform_indices = @transform_7, window_bounds = array<i64: 1, 128>}]} {
    %c0 = arith.constant 0 : index
    %c0_0 = arith.constant 0 : index
    %0 = vector.load %arg2[%c0, %c0_0] : memref<64x5xf32, #tpu.memory_space<vmem>>, vector<64x1xf32>
    %c0_1 = arith.constant 0 : index
    %c0_2 = arith.constant 0 : index
    %1 = vector.load %arg1[%c0_1, %c0_2] : memref<5x128xf32, #tpu.memory_space<vmem>>, vector<1x128xf32>
    %2 = vector.broadcast %0 : vector<64x1xf32> to vector<64x128xf32>
    %3 = vector.broadcast %1 : vector<1x128xf32> to vector<64x128xf32>
    %4 = arith.mulf %2, %3 : vector<64x128xf32>
    %c0_3 = arith.constant 0 : index
    %c1 = arith.constant 1 : index
    %5 = vector.load %arg2[%c0_3, %c1] : memref<64x5xf32, #tpu.memory_space<vmem>>, vector<64x1xf32>
    %c1_4 = arith.constant 1 : index
    %c0_5 = arith.constant 0 : index
    %6 = vector.load %arg1[%c1_4, %c0_5] : memref<5x128xf32, #tpu.memory_space<vmem>>, vector<1x128xf32>
    %7 = vector.broadcast %5 : vector<64x1xf32> to vector<64x128xf32>
    %8 = vector.broadcast %6 : vector<1x128xf32> to vector<64x128xf32>
    %9 = arith.mulf %7, %8 : vector<64x128xf32>
    %10 = arith.addf %4, %9 : vector<64x128xf32>
    %c0_6 = arith.constant 0 : index
    %c2 = arith.constant 2 : index
    %11 = vector.load %arg2[%c0_6, %c2] : memref<64x5xf32, #tpu.memory_space<vmem>>, vector<64x1xf32>
    %c2_7 = arith.constant 2 : index
    %c0_8 = arith.constant 0 : index
    %12 = vector.load %arg1[%c2_7, %c0_8] : memref<5x128xf32, #tpu.memory_space<vmem>>, vector<1x128xf32>
    %13 = vector.broadcast %11 : vector<64x1xf32> to vector<64x128xf32>
    %14 = vector.broadcast %12 : vector<1x128xf32> to vector<64x128xf32>
    %15 = arith.mulf %13, %14 : vector<64x128xf32>
    %16 = arith.addf %10, %15 : vector<64x128xf32>
    %c0_9 = arith.constant 0 : index
    %c3 = arith.constant 3 : index
    %17 = vector.load %arg2[%c0_9, %c3] : memref<64x5xf32, #tpu.memory_space<vmem>>, vector<64x1xf32>
    %c3_10 = arith.constant 3 : index
    %c0_11 = arith.constant 0 : index
    %18 = vector.load %arg1[%c3_10, %c0_11] : memref<5x128xf32, #tpu.memory_space<vmem>>, vector<1x128xf32>
    %19 = vector.broadcast %17 : vector<64x1xf32> to vector<64x128xf32>
    %20 = vector.broadcast %18 : vector<1x128xf32> to vector<64x128xf32>
    %21 = arith.mulf %19, %20 : vector<64x128xf32>
    %22 = arith.addf %16, %21 : vector<64x128xf32>
    %c0_12 = arith.constant 0 : index
    %c4 = arith.constant 4 : index
    %23 = vector.load %arg2[%c0_12, %c4] : memref<64x5xf32, #tpu.memory_space<vmem>>, vector<64x1xf32>
    %c4_13 = arith.constant 4 : index
    %c0_14 = arith.constant 0 : index
    %24 = vector.load %arg1[%c4_13, %c0_14] : memref<5x128xf32, #tpu.memory_space<vmem>>, vector<1x128xf32>
    %25 = vector.broadcast %23 : vector<64x1xf32> to vector<64x128xf32>
    %26 = vector.broadcast %24 : vector<1x128xf32> to vector<64x128xf32>
    %27 = arith.mulf %25, %26 : vector<64x128xf32>
    %28 = arith.addf %22, %27 : vector<64x128xf32>
    %c0_15 = arith.constant 0 : index
    %c0_16 = arith.constant 0 : index
    %29 = vector.load %arg3[%c0_15, %c0_16] : memref<64x1xf32, #tpu.memory_space<vmem>>, vector<64x1xf32>
    %30 = vector.broadcast %29 : vector<64x1xf32> to vector<64x128xf32>
    %31 = arith.addf %28, %30 : vector<64x128xf32>
    %cst = arith.constant 0.000000e+00 : f32
    %32 = vector.broadcast %cst : f32 to vector<64x128xf32>
    %33 = arith.maximumf %31, %32 : vector<64x128xf32>
    %c0_17 = arith.constant 0 : index
    %c0_18 = arith.constant 0 : index
    %34 = vector.load %arg4[%c0_17, %c0_18] : memref<32x64xf32, #tpu.memory_space<vmem>>, vector<32x64xf32>
    %35 = arith.truncf %34 : vector<32x64xf32> to vector<32x64xbf16>
    %36 = arith.truncf %33 : vector<64x128xf32> to vector<64x128xbf16>
    %cst_19 = arith.constant dense<0.000000e+00> : vector<32x128xf32>
    %37 = tpu.matmul %35, %36, %cst_19 {dimension_numbers = #tpu.dot_dimension_numbers<[1], [0], [0], [1], [0, 0, 1, 1], [], []>} : vector<32x64xbf16>, vector<64x128xbf16>, vector<32x128xf32> -> vector<32x128xf32>
    %c0_20 = arith.constant 0 : index
    %c0_21 = arith.constant 0 : index
    %38 = vector.load %arg5[%c0_20, %c0_21] : memref<32x1xf32, #tpu.memory_space<vmem>>, vector<32x1xf32>
    %39 = vector.broadcast %38 : vector<32x1xf32> to vector<32x128xf32>
    %40 = arith.addf %37, %39 : vector<32x128xf32>
    %cst_22 = arith.constant 0.000000e+00 : f32
    %41 = vector.broadcast %cst_22 : f32 to vector<32x128xf32>
    %42 = arith.maximumf %40, %41 : vector<32x128xf32>
    %c0_23 = arith.constant 0 : index
    %c0_24 = arith.constant 0 : index
    %43 = vector.load %arg6[%c0_23, %c0_24] : memref<32x1xf32, #tpu.memory_space<vmem>>, vector<32x1xf32>
    %44 = vector.broadcast %43 : vector<32x1xf32> to vector<32x128xf32>
    %45 = arith.mulf %44, %42 : vector<32x128xf32>
    %cst_25 = arith.constant dense<0.000000e+00> : vector<128xf32>
    %46 = vector.multi_reduction <add>, %45, %cst_25 [0] : vector<32x128xf32> to vector<128xf32>
    %47 = vector.shape_cast %46 : vector<128xf32> to vector<1x128xf32>
    %c0_26 = arith.constant 0 : index
    %c0_27 = arith.constant 0 : index
    %48 = vector.load %arg7[%c0_26, %c0_27] : memref<1x1xf32, #tpu.memory_space<vmem>>, vector<1x1xf32>
    %49 = vector.broadcast %48 : vector<1x1xf32> to vector<1x128xf32>
    %50 = arith.addf %47, %49 : vector<1x128xf32>
    %cst_28 = arith.constant 0.000000e+00 : f32
    %51 = vector.broadcast %cst_28 : f32 to vector<1x128xf32>
    %52 = arith.subf %51, %50 : vector<1x128xf32>
    %53 = math.exp %52 : vector<1x128xf32>
    %cst_29 = arith.constant 1.000000e+00 : f32
    %54 = vector.broadcast %cst_29 : f32 to vector<1x128xf32>
    %55 = arith.addf %54, %53 : vector<1x128xf32>
    %56 = tpu.reciprocal %55 : vector<1x128xf32> -> vector<1x128xf32>
    %c0_30 = arith.constant 0 : index
    %c0_31 = arith.constant 0 : index
    %57 = vector.load %arg8[%c0_30, %c0_31] : memref<1x128xf32, #tpu.memory_space<vmem>>, vector<1x128xf32>
    tpu.vector_store %arg8[%c0_30, %c0_31], %56 {strides = array<i32>} : memref<1x128xf32, #tpu.memory_space<vmem>>, vector<1x128xf32>,
    return
  }
  func.func @transform_0(%arg0: i32) -> (i32, i32) {
    %c0_i32 = arith.constant 0 : i32
    %c0_i32_0 = arith.constant 0 : i32
    return %c0_i32, %arg0 : i32, i32
  }
  func.func @transform_1(%arg0: i32) -> (i32, i32) {
    %c0_i32 = arith.constant 0 : i32
    %c0_i32_0 = arith.constant 0 : i32
    %c0_i32_1 = arith.constant 0 : i32
    return %c0_i32, %c0_i32_0 : i32, i32
  }
  func.func @transform_2(%arg0: i32) -> (i32, i32) {
    %c0_i32 = arith.constant 0 : i32
    %c0_i32_0 = arith.constant 0 : i32
    %c0_i32_1 = arith.constant 0 : i32
    return %c0_i32, %c0_i32_0 : i32, i32
  }
  func.func @transform_3(%arg0: i32) -> (i32, i32) {
    %c0_i32 = arith.constant 0 : i32
    %c0_i32_0 = arith.constant 0 : i32
    %c0_i32_1 = arith.constant 0 : i32
    return %c0_i32, %c0_i32_0 : i32, i32
  }
  func.func @transform_4(%arg0: i32) -> (i32, i32) {
    %c0_i32 = arith.constant 0 : i32
    %c0_i32_0 = arith.constant 0 : i32
    %c0_i32_1 = arith.constant 0 : i32
    return %c0_i32, %c0_i32_0 : i32, i32
  }
  func.func @transform_5(%arg0: i32) -> (i32, i32) {
    %c0_i32 = arith.constant 0 : i32
    %c0_i32_0 = arith.constant 0 : i32
    %c0_i32_1 = arith.constant 0 : i32
    return %c0_i32, %c0_i32_0 : i32, i32
  }
  func.func @transform_6(%arg0: i32) -> (i32, i32) {
    %c0_i32 = arith.constant 0 : i32
    %c0_i32_0 = arith.constant 0 : i32
    %c0_i32_1 = arith.constant 0 : i32
    return %c0_i32, %c0_i32_0 : i32, i32
  }
  func.func @transform_7(%arg0: i32) -> (i32, i32) {
    %c0_i32 = arith.constant 0 : i32
    %c0_i32_0 = arith.constant 0 : i32
    return %c0_i32, %arg0 : i32, i32
  }
}

</mosaic_0001>

<llo_original>
// kernel: mlp_forward.2
$region0: #{mlp_forward.2}
  #allocation0 [shape = 'u32[]', space=smem, size = 0x4, offset = 0x4, fixed_abs, tag = 'smem constant byte address 0x4 - core index']
  #allocation1 [shape = 'u32[144,128]{1,0:T(1,128)}', space=vmem, size = 0x12000, scoped, tag = 'internal scratch']
  #allocation2 [shape = 'u32[2048]{0}', space=vmem, size = 0x2000, scoped, tag = 'scoped memory for mlp_forward.2']
  #allocation3 [shape = 'u32[2048]{0}', space=vmem, size = 0x2000, scoped, tag = 'scoped memory for mlp_forward.2']
  #allocation4 [shape = 'u32[2048]{0}', space=vmem, size = 0x2000, scoped, tag = 'scoped memory for mlp_forward.2']
  #allocation5 [shape = 'u32[2048]{0}', space=vmem, size = 0x2000, scoped, tag = 'scoped memory for mlp_forward.2']
  #allocation6 [shape = 'u32[2048]{0}', space=vmem, size = 0x2000, scoped, tag = 'scoped memory for mlp_forward.2']
  #allocation7 [shape = 'f32[1,1]{1,0:T(1,128)S(1)}', space=vmem, size = 0x200, scoped, tag = 'scoped memory for mlp_forward.2']
  %s0 = inlined_call_operand.vmem [shape: f32[64,5], index: 0, kind: input, shape index: {}]
  %s1 = inlined_call_operand.vmem [shape: f32[64,1], index: 1, kind: input, shape index: {}]
  %s2 = inlined_call_operand.vmem [shape: f32[32,64], index: 2, kind: input, shape index: {}]
  %s3 = inlined_call_operand.vmem [shape: f32[32,1], index: 3, kind: input, shape index: {}]
  %s4 = inlined_call_operand.vmem [shape: f32[32,1], index: 4, kind: input, shape index: {}]
  %s5 = inlined_call_operand.<no memory space> [shape: f32[1,1], index: 5, kind: input, shape index: {}]
  %s6 = inlined_call_operand.vmem [shape: f32[8,5], index: 6, kind: input, shape index: {}]
  %s7 = inlined_call_operand.<no memory space> [shape: f32[], index: 7, kind: input, shape index: {}]
  %s8 = inlined_call_operand.vmem [shape: f32[1,128], index: 8, kind: output, shape index: {}]
  %s9 = sld [smem:[#allocation0]]
  $region38: #{mlp_forward.2} parent=0
    _
  %s11 = ssub.s32 1, %s9
  %s12 = scalar_select 0, %s11, %s9
  %v13 = vstv %s7
  %v14 = vstv %s5
  %15 = vst [vmem:[#allocation7] sm:$0x1] %v14
  $region1: #{mlp_forward.2} parent=0
    #allocation8 [shape = 'u8[4096]{0}', space=vmem, size = 0x1000, dematerialized = true, scoped, tag = 'FusionAdapter Buffer %fusion.1 = f32[5,128]{1,0:T(8,128)} fusion(%param_6.2, %param_7), kind=kLoop, calls=%fused_computation.1.clone, metadata={op_name="jit(mlp_forward)/transpose" stack_frame_id=9}']
    // Predicated region
    $region2: #{mlp_forward.2} parent=1 // pred_check
      _
    $region3: #{mlp_forward.2} parent=1 // pred_check_branch
      %17 = sbr.rel (0) target = $region5
    $region4: #{mlp_forward.2} parent=1 // pred_region
      _
    $region5: #{mlp_forward.2} parent=1 // pred_fallthru
      _
    // Predicated region
    $region6: #{mlp_forward.2} parent=1 // pred_check
      _
    $region7: #{mlp_forward.2} parent=1 // pred_check_branch
      %19 = sbr.rel (0) target = $region9
    $region8: #{mlp_forward.2} parent=1 // pred_region
      _
    $region9: #{mlp_forward.2} parent=1 // pred_fallthru
      _
    // Predicated region
    $region10: #{mlp_forward.2} parent=1 // pred_check
      _
    $region11: #{mlp_forward.2} parent=1 // pred_check_branch
      %21 = sbr.rel (0) target = $region13
    $region12: #{mlp_forward.2} parent=1 // pred_region
      _
    $region13: #{mlp_forward.2} parent=1 // pred_fallthru
      _
    // Predicated region
    $region14: #{mlp_forward.2} parent=1 // pred_check
      _
    $region15: #{mlp_forward.2} parent=1 // pred_check_branch
      %23 = sbr.rel (0) target = $region17
    $region16: #{mlp_forward.2} parent=1 // pred_region
      _
    $region17: #{mlp_forward.2} parent=1 // pred_fallthru
      _
    // Predicated region
    $region18: #{mlp_forward.2} parent=1 // pred_check
      _
    $region19: #{mlp_forward.2} parent=1 // pred_check_branch
      %25 = sbr.rel (0) target = $region21
    $region20: #{mlp_forward.2} parent=1 // pred_region
      _
    $region21: #{mlp_forward.2} parent=1 // pred_fallthru
      _
    // Predicated region
    $region22: #{mlp_forward.2} parent=1 // pred_check
      _
    $region23: #{mlp_forward.2} parent=1 // pred_check_branch
      %27 = sbr.rel (0) target = $region25
    $region24: #{mlp_forward.2} parent=1 // pred_region
      _
    $region25: #{mlp_forward.2} parent=1 // pred_fallthru
      _
    // Predicated region
    $region26: #{mlp_forward.2} parent=1 // pred_check
      _
    $region27: #{mlp_forward.2} parent=1 // pred_check_branch
      %29 = sbr.rel (0) target = $region29
    $region28: #{mlp_forward.2} parent=1 // pred_region
      _
    $region29: #{mlp_forward.2} parent=1 // pred_fallthru
      _
    %v30 = vld [vmem:[%s6] sm:$0x1f]
    %v31 = vlaneseq
    %v32 = vshrl.u32 %v31, 7
    %vm34 = vcmp.lt.s32.totalorder %v32, 5
    %v35 = vsel %vm34, %v30, %v13
    %v36 = vlaneseq
    %v37 = vand.u32 %v36, 127
    %vm39 = vcmp.lt.s32.totalorder %v37, 8
    %v40 = vsel %vm39, %v35, %v13
    %42 = vst [vmem:[#allocation8] sm:$0xff] %v40
    %v44 = vld [vmem:[%s0] sm:$0xff]
    %v45 = vld [vmem:[%s0 + $0x8] sm:$0xff]
    %v46 = vld [vmem:[%s0 + $0x10] sm:$0xff]
    %v47 = vld [vmem:[%s0 + $0x18] sm:$0xff]
    %v48 = vld [vmem:[%s0 + $0x20] sm:$0xff]
    %v49 = vld [vmem:[%s0 + $0x28] sm:$0xff]
    %v50 = vld [vmem:[%s0 + $0x30] sm:$0xff]
    %v51 = vld [vmem:[%s0 + $0x38] sm:$0xff]
    %v52 = vld [vmem:[#allocation8] sm:$0x1]
    %54 = vset.pattern.permute.xlu0 0
    %55 = vperm.xlu0 %54, %v44
    %v56 = vpop.permute.xlu0 %55
    %59 = vset.pattern.permute.xlu0 0
    %60 = vperm.xlu0 %59, %v45
    %v61 = vpop.permute.xlu0 %60
    %64 = vset.pattern.permute.xlu0 0
    %65 = vperm.xlu0 %64, %v46
    %v66 = vpop.permute.xlu0 %65
    %69 = vset.pattern.permute.xlu0 0
    %70 = vperm.xlu0 %69, %v47
    %v71 = vpop.permute.xlu0 %70
    %74 = vset.pattern.permute.xlu0 0
    %75 = vperm.xlu0 %74, %v48
    %v76 = vpop.permute.xlu0 %75
    %79 = vset.pattern.permute.xlu0 0
    %80 = vperm.xlu0 %79, %v49
    %v81 = vpop.permute.xlu0 %80
    %84 = vset.pattern.permute.xlu0 0
    %85 = vperm.xlu0 %84, %v50
    %v86 = vpop.permute.xlu0 %85
    %89 = vset.pattern.permute.xlu0 0
    %90 = vperm.xlu0 %89, %v51
    %v91 = vpop.permute.xlu0 %90
    %v93 = vlaneseq
    %v94 = vshrl.u32 %v93, 7
    %v95 = vsub.s32 0, %v94
    %v96 = vrot.slane %v52, %v95
    %v97 = vmul.f32 %v56, %v96
    %v98 = vmul.f32 %v61, %v96
    %v99 = vmul.f32 %v66, %v96
    %v100 = vmul.f32 %v71, %v96
    %v101 = vmul.f32 %v76, %v96
    %v102 = vmul.f32 %v81, %v96
    %v103 = vmul.f32 %v86, %v96
    %v104 = vmul.f32 %v91, %v96
    %v105 = vld [vmem:[#allocation8 + $0x1] sm:$0x1]
    %106 = vset.pattern.permute.xlu0 1
    %107 = vperm.xlu0 %106, %v44
    %v108 = vpop.permute.xlu0 %107
    %110 = vset.pattern.permute.xlu0 1
    %111 = vperm.xlu0 %110, %v45
    %v112 = vpop.permute.xlu0 %111
    %114 = vset.pattern.permute.xlu0 1
    %115 = vperm.xlu0 %114, %v46
    %v116 = vpop.permute.xlu0 %115
    %118 = vset.pattern.permute.xlu0 1
    %119 = vperm.xlu0 %118, %v47
    %v120 = vpop.permute.xlu0 %119
    %122 = vset.pattern.permute.xlu0 1
    %123 = vperm.xlu0 %122, %v48
    %v124 = vpop.permute.xlu0 %123
    %126 = vset.pattern.permute.xlu0 1
    %127 = vperm.xlu0 %126, %v49
    %v128 = vpop.permute.xlu0 %127
    %130 = vset.pattern.permute.xlu0 1
    %131 = vperm.xlu0 %130, %v50
    %v132 = vpop.permute.xlu0 %131
    %134 = vset.pattern.permute.xlu0 1
    %135 = vperm.xlu0 %134, %v51
    %v136 = vpop.permute.xlu0 %135
    %v138 = vlaneseq
    %v139 = vshrl.u32 %v138, 7
    %v140 = vsub.s32 0, %v139
    %v141 = vrot.slane %v105, %v140
    %v142 = vmul.f32 %v108, %v141
    %v143 = vmul.f32 %v112, %v141
    %v144 = vmul.f32 %v116, %v141
    %v145 = vmul.f32 %v120, %v141
    %v146 = vmul.f32 %v124, %v141
    %v147 = vmul.f32 %v128, %v141
    %v148 = vmul.f32 %v132, %v141
    %v149 = vmul.f32 %v136, %v141
    %v150 = vadd.f32 %v97, %v142
    %v151 = vadd.f32 %v98, %v143
    %v152 = vadd.f32 %v99, %v144
    %v153 = vadd.f32 %v100, %v145
    %v154 = vadd.f32 %v101, %v146
    %v155 = vadd.f32 %v102, %v147
    %v156 = vadd.f32 %v103, %v148
    %v157 = vadd.f32 %v104, %v149
    %v158 = vld [vmem:[#allocation8 + $0x2] sm:$0x1]
    %159 = vset.pattern.permute.xlu0 2
    %160 = vperm.xlu0 %159, %v44
    %v161 = vpop.permute.xlu0 %160
    %163 = vset.pattern.permute.xlu0 2
    %164 = vperm.xlu0 %163, %v45
    %v165 = vpop.permute.xlu0 %164
    %167 = vset.pattern.permute.xlu0 2
    %168 = vperm.xlu0 %167, %v46
    %v169 = vpop.permute.xlu0 %168
    %171 = vset.pattern.permute.xlu0 2
    %172 = vperm.xlu0 %171, %v47
    %v173 = vpop.permute.xlu0 %172
    %175 = vset.pattern.permute.xlu0 2
    %176 = vperm.xlu0 %175, %v48
    %v177 = vpop.permute.xlu0 %176
    %179 = vset.pattern.permute.xlu0 2
    %180 = vperm.xlu0 %179, %v49
    %v181 = vpop.permute.xlu0 %180
    %183 = vset.pattern.permute.xlu0 2
    %184 = vperm.xlu0 %183, %v50
    %v185 = vpop.permute.xlu0 %184
    %187 = vset.pattern.permute.xlu0 2
    %188 = vperm.xlu0 %187, %v51
    %v189 = vpop.permute.xlu0 %188
    %v191 = vlaneseq
    %v192 = vshrl.u32 %v191, 7
    %v193 = vsub.s32 0, %v192
    %v194 = vrot.slane %v158, %v193
    %v195 = vmul.f32 %v161, %v194
    %v196 = vmul.f32 %v165, %v194
    %v197 = vmul.f32 %v169, %v194
    %v198 = vmul.f32 %v173, %v194
    %v199 = vmul.f32 %v177, %v194
    %v200 = vmul.f32 %v181, %v194
    %v201 = vmul.f32 %v185, %v194
    %v202 = vmul.f32 %v189, %v194
    %v203 = vadd.f32 %v150, %v195
    %v204 = vadd.f32 %v151, %v196
    %v205 = vadd.f32 %v152, %v197
    %v206 = vadd.f32 %v153, %v198
    %v207 = vadd.f32 %v154, %v199
    %v208 = vadd.f32 %v155, %v200
    %v209 = vadd.f32 %v156, %v201
    %v210 = vadd.f32 %v157, %v202
    %v211 = vld [vmem:[#allocation8 + $0x3] sm:$0x1]
    %212 = vset.pattern.permute.xlu0 3
    %213 = vperm.xlu0 %212, %v44
    %v214 = vpop.permute.xlu0 %213
    %216 = vset.pattern.permute.xlu0 3
    %217 = vperm.xlu0 %216, %v45
    %v218 = vpop.permute.xlu0 %217
    %220 = vset.pattern.permute.xlu0 3
    %221 = vperm.xlu0 %220, %v46
    %v222 = vpop.permute.xlu0 %221
    %224 = vset.pattern.permute.xlu0 3
    %225 = vperm.xlu0 %224, %v47
    %v226 = vpop.permute.xlu0 %225
    %228 = vset.pattern.permute.xlu0 3
    %229 = vperm.xlu0 %228, %v48
    %v230 = vpop.permute.xlu0 %229
    %232 = vset.pattern.permute.xlu0 3
    %233 = vperm.xlu0 %232, %v49
    %v234 = vpop.permute.xlu0 %233
    %236 = vset.pattern.permute.xlu0 3
    %237 = vperm.xlu0 %236, %v50
    %v238 = vpop.permute.xlu0 %237
    %240 = vset.pattern.permute.xlu0 3
    %241 = vperm.xlu0 %240, %v51
    %v242 = vpop.permute.xlu0 %241
    %v244 = vlaneseq
    %v245 = vshrl.u32 %v244, 7
    %v246 = vsub.s32 0, %v245
    %v247 = vrot.slane %v211, %v246
    %v248 = vmul.f32 %v214, %v247
    %v249 = vmul.f32 %v218, %v247
    %v250 = vmul.f32 %v222, %v247
    %v251 = vmul.f32 %v226, %v247
    %v252 = vmul.f32 %v230, %v247
    %v253 = vmul.f32 %v234, %v247
    %v254 = vmul.f32 %v238, %v247
    %v255 = vmul.f32 %v242, %v247
    %v256 = vadd.f32 %v203, %v248
    %v257 = vadd.f32 %v204, %v249
    %v258 = vadd.f32 %v205, %v250
    %v259 = vadd.f32 %v206, %v251
    %v260 = vadd.f32 %v207, %v252
    %v261 = vadd.f32 %v208, %v253
    %v262 = vadd.f32 %v209, %v254
    %v263 = vadd.f32 %v210, %v255
    %v264 = vld [vmem:[#allocation8 + $0x4] sm:$0x1]
    %265 = vset.pattern.permute.xlu0 4
    %266 = vperm.xlu0 %265, %v44
    %v267 = vpop.permute.xlu0 %266
    %269 = vset.pattern.permute.xlu0 4
    %270 = vperm.xlu0 %269, %v45
    %v271 = vpop.permute.xlu0 %270
    %273 = vset.pattern.permute.xlu0 4
    %274 = vperm.xlu0 %273, %v46
    %v275 = vpop.permute.xlu0 %274
    %277 = vset.pattern.permute.xlu0 4
    %278 = vperm.xlu0 %277, %v47
    %v279 = vpop.permute.xlu0 %278
    %281 = vset.pattern.permute.xlu0 4
    %282 = vperm.xlu0 %281, %v48
    %v283 = vpop.permute.xlu0 %282
    %285 = vset.pattern.permute.xlu0 4
    %286 = vperm.xlu0 %285, %v49
    %v287 = vpop.permute.xlu0 %286
    %289 = vset.pattern.permute.xlu0 4
    %290 = vperm.xlu0 %289, %v50
    %v291 = vpop.permute.xlu0 %290
    %293 = vset.pattern.permute.xlu0 4
    %294 = vperm.xlu0 %293, %v51
    %v295 = vpop.permute.xlu0 %294
    %v297 = vlaneseq
    %v298 = vshrl.u32 %v297, 7
    %v299 = vsub.s32 0, %v298
    %v300 = vrot.slane %v264, %v299
    %v301 = vmul.f32 %v267, %v300
    %v302 = vmul.f32 %v271, %v300
    %v303 = vmul.f32 %v275, %v300
    %v304 = vmul.f32 %v279, %v300
    %v305 = vmul.f32 %v283, %v300
    %v306 = vmul.f32 %v287, %v300
    %v307 = vmul.f32 %v291, %v300
    %v308 = vmul.f32 %v295, %v300
    %v309 = vadd.f32 %v256, %v301
    %v310 = vadd.f32 %v257, %v302
    %v311 = vadd.f32 %v258, %v303
    %v312 = vadd.f32 %v259, %v304
    %v313 = vadd.f32 %v260, %v305
    %v314 = vadd.f32 %v261, %v306
    %v315 = vadd.f32 %v262, %v307
    %v316 = vadd.f32 %v263, %v308
    %v317 = vld [vmem:[%s1] sm:$0xff]
    %v318 = vld [vmem:[%s1 + $0x8] sm:$0xff]
    %v319 = vld [vmem:[%s1 + $0x10] sm:$0xff]
    %v320 = vld [vmem:[%s1 + $0x18] sm:$0xff]
    %v321 = vld [vmem:[%s1 + $0x20] sm:$0xff]
    %v322 = vld [vmem:[%s1 + $0x28] sm:$0xff]
    %v323 = vld [vmem:[%s1 + $0x30] sm:$0xff]
    %v324 = vld [vmem:[%s1 + $0x38] sm:$0xff]
    %326 = vset.pattern.permute.xlu0 0
    %327 = vperm.xlu0 %326, %v317
    %v328 = vpop.permute.xlu0 %327
    %331 = vset.pattern.permute.xlu0 0
    %332 = vperm.xlu0 %331, %v318
    %v333 = vpop.permute.xlu0 %332
    %336 = vset.pattern.permute.xlu0 0
    %337 = vperm.xlu0 %336, %v319
    %v338 = vpop.permute.xlu0 %337
    %341 = vset.pattern.permute.xlu0 0
    %342 = vperm.xlu0 %341, %v320
    %v343 = vpop.permute.xlu0 %342
    %346 = vset.pattern.permute.xlu0 0
    %347 = vperm.xlu0 %346, %v321
    %v348 = vpop.permute.xlu0 %347
    %351 = vset.pattern.permute.xlu0 0
    %352 = vperm.xlu0 %351, %v322
    %v353 = vpop.permute.xlu0 %352
    %356 = vset.pattern.permute.xlu0 0
    %357 = vperm.xlu0 %356, %v323
    %v358 = vpop.permute.xlu0 %357
    %361 = vset.pattern.permute.xlu0 0
    %362 = vperm.xlu0 %361, %v324
    %v363 = vpop.permute.xlu0 %362
    %v365 = vadd.f32 %v309, %v328
    %v366 = vadd.f32 %v310, %v333
    %v367 = vadd.f32 %v311, %v338
    %v368 = vadd.f32 %v312, %v343
    %v369 = vadd.f32 %v313, %v348
    %v370 = vadd.f32 %v314, %v353
    %v371 = vadd.f32 %v315, %v358
    %v372 = vadd.f32 %v316, %v363
    %v373 = vmax.f32 %v365, 0.0
    %v374 = vmax.f32 %v366, 0.0
    %v375 = vmax.f32 %v367, 0.0
    %v376 = vmax.f32 %v368, 0.0
    %v377 = vmax.f32 %v369, 0.0
    %v378 = vmax.f32 %v370, 0.0
    %v379 = vmax.f32 %v371, 0.0
    %v380 = vmax.f32 %v372, 0.0
    %v381 = vld [vmem:[%s2] sm:$0xff]
    %v382 = vld [vmem:[%s2 + $0x8] sm:$0xff]
    %v383 = vld [vmem:[%s2 + $0x10] sm:$0xff]
    %v384 = vld [vmem:[%s2 + $0x18] sm:$0xff]
    %v385 = vpack.c.bf16 %v382, %v381
    %v386 = vpack.c.bf16 %v384, %v383
    %v387 = vpack.c.bf16 %v374, %v373
    %v388 = vpack.c.bf16 %v376, %v375
    %v389 = vpack.c.bf16 %v378, %v377
    %v390 = vpack.c.bf16 %v380, %v379
    %v391 = vld [vmem:[%s3] sm:$0xff]
    %v392 = vld [vmem:[%s3 + $0x8] sm:$0xff]
    %v393 = vld [vmem:[%s3 + $0x10] sm:$0xff]
    %v394 = vld [vmem:[%s3 + $0x18] sm:$0xff]
    %396 = vset.pattern.permute.xlu0 0
    %397 = vperm.xlu0 %396, %v391
    %v398 = vpop.permute.xlu0 %397
    %401 = vset.pattern.permute.xlu0 0
    %402 = vperm.xlu0 %401, %v392
    %v403 = vpop.permute.xlu0 %402
    %406 = vset.pattern.permute.xlu0 0
    %407 = vperm.xlu0 %406, %v393
    %v408 = vpop.permute.xlu0 %407
    %411 = vset.pattern.permute.xlu0 0
    %412 = vperm.xlu0 %411, %v394
    %v413 = vpop.permute.xlu0 %412
    %vm415 = vcmask 523264
    %v417 = vsel %vm415, %v385, 0
    %v420 = vsel %vm415, %v386, 0
    %422 = vmatprep.subr.bf16.mxu0 0
    %423 = vmatpush1.bf16.msra.mxu0 %v387
    %424 = vmatprep.subr.bf16.mxu0 0
    %425 = vmatpush1.bf16.msra.mxu0 %v388
    %426 = vmatprep.subr.bf16.mxu0 0
    %427 = vmatpush1.bf16.msra.mxu0 %v389
    %428 = vmatprep.subr.bf16.mxu0 0
    %429 = vmatpush1.bf16.msra.mxu0 %v390
    %430 = vmatprep.subr.bf16.mxu0 0
    %431 = vmatpush1.bf16.msra.mxu0 0
    %432 = vmatprep.subr.bf16.mxu0 0
    %433 = vmatpush1.bf16.msra.mxu0 0
    %434 = vmatprep.subr.bf16.mxu0 0
    %435 = vmatpush1.bf16.msra.mxu0 0
    %436 = vmatprep.subr.bf16.mxu0 0
    %437 = vmatpush1.bf16.msra.mxu0 0
    %438 = vmatprep.subr.bf16.mxu0 0
    %439 = vmatpush1.bf16.msra.mxu0 0
    %440 = vmatprep.subr.bf16.mxu0 0
    %441 = vmatpush1.bf16.msra.mxu0 0
    %442 = vmatprep.subr.bf16.mxu0 0
    %443 = vmatpush1.bf16.msra.mxu0 0
    %444 = vmatprep.subr.bf16.mxu0 0
    %445 = vmatpush1.bf16.msra.mxu0 0
    %446 = vmatprep.subr.bf16.mxu0 0
    %447 = vmatpush1.bf16.msra.mxu0 0
    %448 = vmatprep.subr.bf16.mxu0 0
    %449 = vmatpush1.bf16.msra.mxu0 0
    %450 = vmatprep.subr.bf16.mxu0 0
    %451 = vmatpush1.bf16.msra.mxu0 0
    %452 = vmatprep.subr.bf16.mxu0 0
    %453 = vmatpush1.bf16.msra.mxu0 0
    %454 = vmatprep.mubr.bf16.mxu0 0
    %455 = vmatmul.mubr.bf16.gmra.mrb[0].mxu0 %v417
    %v456 = vpop.f32.mrb[0].mxu0
    %v457 = vadd.f32 %v398, %v456
    %v458 = vpop.f32.mrb[0].mxu0
    %v459 = vpop.f32.mrb[0].mxu0
    %v460 = vadd.f32 %v403, %v459
    %v461 = vpop.f32.mrb[0].mxu0
    %462 = vmatprep.mubr.bf16.mxu0 0
    %463 = vmatmul.mubr.bf16.gmra.mrb[0].mxu0 %v420
    %v464 = vpop.f32.mrb[0].mxu0
    %v465 = vadd.f32 %v408, %v464
    %v466 = vpop.f32.mrb[0].mxu0
    %v467 = vpop.f32.mrb[0].mxu0
    %v468 = vadd.f32 %v413, %v467
    %v469 = vpop.f32.mrb[0].mxu0
    %470 = vdwg.mxu0
    %v471 = vmax.f32 %v457, 0.0
    %v472 = vmax.f32 %v460, 0.0
    %v473 = vmax.f32 %v465, 0.0
    %v474 = vmax.f32 %v468, 0.0
    %v475 = vld [vmem:[%s4] sm:$0xff]
    %v476 = vld [vmem:[%s4 + $0x8] sm:$0xff]
    %v477 = vld [vmem:[%s4 + $0x10] sm:$0xff]
    %v478 = vld [vmem:[%s4 + $0x18] sm:$0xff]
    %480 = vset.pattern.permute.xlu0 0
    %481 = vperm.xlu0 %480, %v475
    %v482 = vpop.permute.xlu0 %481
    %485 = vset.pattern.permute.xlu0 0
    %486 = vperm.xlu0 %485, %v476
    %v487 = vpop.permute.xlu0 %486
    %490 = vset.pattern.permute.xlu0 0
    %491 = vperm.xlu0 %490, %v477
    %v492 = vpop.permute.xlu0 %491
    %495 = vset.pattern.permute.xlu0 0
    %496 = vperm.xlu0 %495, %v478
    %v497 = vpop.permute.xlu0 %496
    %v499 = vmul.f32 %v482, %v471
    %v500 = vmul.f32 %v487, %v472
    %v501 = vmul.f32 %v492, %v473
    %v502 = vmul.f32 %v497, %v474
    %v503 = vadd.f32 %v499, %v500
    %v504 = vadd.f32 %v503, %v501
    %v505 = vadd.f32 %v504, %v502
    %v506 = vrot.slane %v505, 4
    %v507 = vadd.f32 %v505, %v506
    %v508 = vrot.slane %v507, 2
    %v509 = vadd.f32 %v507, %v508
    %v510 = vrot.slane %v509, 1
    %v511 = vadd.f32 %v509, %v510
    %v512 = vld [vmem:[#allocation7] sm:$0x1]
    %514 = vset.pattern.permute.xlu0 0
    %515 = vperm.xlu0 %514, %v512
    %v516 = vpop.permute.xlu0 %515
    %v518 = vlaneseq
    %v519 = vshrl.u32 %v518, 7
    %v520 = vsub.s32 0, %v519
    %v521 = vrot.slane %v516, %v520
    %v522 = vadd.f32 %v511, %v521
    %v523 = vsub.f32 0.0, %v522
    %v524 = vmul.f32 %v523, 1.442695
    %v525 = vpow.pop %v524
    %v526 = vadd.f32 %v525, 1.0
    %v527 = vrcp.pop %v526
    %528 = vst [vmem:[%s8] sm:$0x1] %v527
    // Predicated region
    $region30: #{mlp_forward.2} parent=1 // pred_check
      _
    $region31: #{mlp_forward.2} parent=1 // pred_check_branch
      %530 = sbr.rel (0) target = $region33
    $region32: #{mlp_forward.2} parent=1 // pred_region
      _
    $region33: #{mlp_forward.2} parent=1 // pred_fallthru
      _
    // Predicated region
    $region34: #{mlp_forward.2} parent=1 // pred_check
      _
    $region35: #{mlp_forward.2} parent=1 // pred_check_branch
      %532 = sbr.rel (0) target = $region37
    $region36: #{mlp_forward.2} parent=1 // pred_region
      _
    $region37: #{mlp_forward.2} parent=1 // pred_fallthru
      _

</llo_original>
